<compile_context>
chip_gen: v6e
topology: v6e:2x2x1
jax: 0.10.0
libtpu: 0.0.40
codegen_flags: <defaults>
</compile_context>

<pallas_src>
import math
import functools

import jax
import jax.numpy as jnp
from jax.experimental import pallas as pl
from jax.experimental.pallas import tpu as pltpu

# ---------------- model hyper-parameters (small, consistent with the module) ----
INPUT_DIM = 50         # vocab size
EMB_DIM = 32
HIDDEN_DIM = 32
N_LAYERS = 2
DROPOUT = 0.0          # identity at inference
KERNEL_SIZE = 3        # must be odd
POSITION_LENGTH = 16
PAD = (KERNEL_SIZE - 1) // 2
SCALE = math.sqrt(0.5)

BATCH = 2
SRC_LEN = 8


# ---------------------------- Pallas kernel -------------------------------------
def _encoder_kernel(ids_ref, emb_ref, we_ref, be_ref, cw_ref, cb_ref, wh_ref, bh_ref,
                    out_ref, *, n_layers, kernel_size, pad, hidden_dim, seq_len,
                    vocab, pos_len):
    # ids_ref: (Nc, 1)                 flattened (batch-chunk * L,) token ids, int32
    # emb_ref: (V+P, E)                [token_embedding ‖ position_embedding], f32
    # we_ref:  (E, H)                  embedding_to_hidden weight (transposed)
    # be_ref:  (1, H)                  embedding_to_hidden bias, f32
    # cw_ref:  (n_layers, K*H, 2H)     im2col conv weights (k-major rows)
    # cb_ref:  (n_layers, 1, 2H)       conv biases, f32
    # wh_ref:  (H, E)                  hidden_to_embedding weight (transposed)
    # bh_ref:  (1, E)                  hidden_to_embedding bias, f32
    # out_ref: (Nc, 2E)                [conved | combined] concatenated along lanes
    ids = ids_ref[...]                                               # (Nc, 1) int32
    n_rows = ids.shape[0]

    # Position of each flattened row within its length-L sequence (used both for the
    # position embedding and for the conv edge masks / batch-boundary isolation).
    row = jax.lax.broadcasted_iota(jnp.int32, (n_rows, 1), 0)        # (Nc, 1)
    if (seq_len & (seq_len - 1)) == 0:                               # power-of-two fast path
        pos = jax.lax.bitwise_and(row, seq_len - 1)
    else:
        pos = row % seq_len

    # Fused embedding gather: exact one-hot [tok | pos] against the concatenated
    # table, one MXU push  ->  token_embedding(src) + position_embedding(pos).
    tok_oh = (jax.lax.broadcasted_iota(jnp.int32, (n_rows, vocab), 1)
              == ids).astype(jnp.float32)                            # (Nc, V)
    pos_oh = (jax.lax.broadcasted_iota(jnp.int32, (n_rows, pos_len), 1)
              == pos).astype(jnp.float32)                            # (Nc, P)
    onehot = jnp.concatenate([tok_oh, pos_oh], axis=-1)              # (Nc, V+P)
    x = jnp.dot(onehot, emb_ref[...],
                preferred_element_type=jnp.float32)                  # (Nc, E) f32

    # embedding_to_hidden (MXU; accumulate in f32)
    h = jnp.dot(x.astype(we_ref.dtype), we_ref[...],
                preferred_element_type=jnp.float32) + be_ref[...]    # (Nc, H) f32

    # Hoisted edge masks, pre-broadcast to full (Nc, H) f32 ONCE (JAX doesn't CSE
    # broadcast_in_dim).  Masking with (0 <= pos+d < L) reproduces PyTorch zero
    # padding AND prevents the roll from leaking rows across batch boundaries.
    masks = {}
    for k in range(kernel_size):
        d = k - pad
        if d != 0:
            valid = jnp.logical_and(pos + d >= 0, pos + d < seq_len)          # (Nc, 1)
            masks[d] = jnp.broadcast_to(valid, (n_rows, hidden_dim)).astype(jnp.float32)

    for layer in range(n_layers):
        # im2col: gather the K shifted copies of h along lanes -> (Nc, K*H),
        # then a single MXU push against the (K*H, 2H) stacked weight.
        taps = []
        for k in range(kernel_size):
            d = k - pad
            if d == 0:
                taps.append(h)
            else:
                shifted = pltpu.roll(h, shift=(-d) % n_rows, axis=0)
                taps.append(shifted * masks[d])
        x3 = jnp.concatenate(taps, axis=-1)                           # (Nc, K*H)
        acc = jnp.dot(x3.astype(cw_ref.dtype), cw_ref[layer],
                      preferred_element_type=jnp.float32) + cb_ref[layer]   # (Nc, 2H)

        # GLU along channels (== torch dim=1 in NCL layout), residual, scale — all f32.
        a = acc[:, :hidden_dim]
        b = acc[:, hidden_dim:]
        h = (a * jax.nn.sigmoid(b) + h) * SCALE

    # hidden_to_embedding
    conved = jnp.dot(h.astype(wh_ref.dtype), wh_ref[...],
                     preferred_element_type=jnp.float32) + bh_ref[...]      # (Nc, E)
    combined = (conved + x) * SCALE

    # Single concatenated store (halves masked-store count vs two E-wide outputs).
    out_ref[...] = jnp.concatenate([conved, combined], axis=-1)       # (Nc, 2E)


# ------------------------------ chunking policy ----------------------------------
def _auto_chunking(batch, seq_len):
    """Grid chunking across rows.

    - Single chunk on single-TC chips (v5e/v6e) and on v7x at small sizes.
    - 2 CORE_PARALLEL chunks on v7x only once each core gets >= 512 rows
      (below that the per-step overhead + duplicated weight DMA dominates).
    - VMEM-aware row cap for very large batches: ~2 KB live/row; v7x has 64 MiB
      physical VMEM (32 MiB scoped default) vs 128 MiB on v5e/v6e.
    """
    rows = batch * seq_len
    try:
        kind = jax.devices()[0].device_kind.lower()
    except Exception:
        kind = ""
    dual_tc = ("v7" in kind) or ("tpu7" in kind)
    max_rows_per_chunk = 4096 if dual_tc else 8192
    chunks = 1
    if dual_tc and batch % 2 == 0 and rows // 2 >= 512:
        chunks = 2
    while rows // chunks > max_rows_per_chunk and batch % (chunks * 2) == 0:
        chunks *= 2
    if chunks == 1:
        semantics = ("arbitrary",)
    elif dual_tc and chunks == 2:
        semantics = (pltpu.CORE_PARALLEL,)
    else:
        semantics = ("parallel",)
    return chunks, semantics


# -------------------------------- wrapper ----------------------------------------
def encoder_pallas(src, tok_emb, pos_emb, we, be, cw, cb, wh, bh, *,
                   use_bf16=False, num_chunks=None):
    B, L = src.shape
    V, E = tok_emb.shape
    P = pos_emb.shape[0]
    H = we.shape[1]
    n_layers, K = cw.shape[0], cw.shape[1]

    if num_chunks is None:
        num_chunks, semantics = _auto_chunking(B, L)
    else:
        semantics = ("arbitrary",) if num_chunks == 1 else ("parallel",)
    rows_per_chunk = (B // num_chunks) * L
    n_rows = B * L
    # Keep sublane layout clean for the in-kernel roll.
    assert rows_per_chunk % 8 == 0, "rows per grid chunk must be a multiple of 8"

    # Fold batch into the row dimension; pass raw ids (gather happens in-kernel).
    ids = src.reshape(n_rows, 1).astype(jnp.int32)
    emb_cat = jnp.concatenate([tok_emb, pos_emb], axis=0).astype(jnp.float32)  # (V+P, E)
    # Stack the K taps into one (K*H, 2H) weight per layer (k-major rows).
    cw_flat = cw.reshape(n_layers, K * H, 2 * H)

    # bf16 matmul operands help on ALL generations (v5e's MXU is bf16-native too);
    # elementwise math + embedding gather stay f32.  Default f32 == exact PyTorch.
    if use_bf16:
        we_m = we.astype(jnp.bfloat16)
        cw_m = cw_flat.astype(jnp.bfloat16)
        wh_m = wh.astype(jnp.bfloat16)
    else:
        we_m, cw_m, wh_m = we, cw_flat, wh

    kernel = functools.partial(
        _encoder_kernel, n_layers=n_layers, kernel_size=K, pad=(K - 1) // 2,
        hidden_dim=H, seq_len=L, vocab=V, pos_len=P)

    out = pl.pallas_call(
        kernel,
        out_shape=jax.ShapeDtypeStruct((n_rows, 2 * E), jnp.float32),
        grid_spec=pltpu.PrefetchScalarGridSpec(
            num_scalar_prefetch=0,
            grid=(num_chunks,),
            in_specs=[
                pl.BlockSpec((rows_per_chunk, 1), lambda i: (i, 0)),          # src ids
                pl.BlockSpec((V + P, E), lambda i: (0, 0)),                   # emb table
                pl.BlockSpec((E, H), lambda i: (0, 0)),                       # we
                pl.BlockSpec((1, H), lambda i: (0, 0)),                       # be
                pl.BlockSpec((n_layers, K * H, 2 * H), lambda i: (0, 0, 0)),  # cw (im2col)
                pl.BlockSpec((n_layers, 1, 2 * H), lambda i: (0, 0, 0)),      # cb
                pl.BlockSpec((H, E), lambda i: (0, 0)),                       # wh
                pl.BlockSpec((1, E), lambda i: (0, 0)),                       # bh
            ],
            out_specs=pl.BlockSpec((rows_per_chunk, 2 * E), lambda i: (i, 0)),
        ),
        compiler_params=pltpu.CompilerParams(dimension_semantics=semantics),
    )(ids, emb_cat, we_m, be, cw_m, cb, wh_m, bh)

    # TODO(synk): if the consumer can take the packed (B*L, 2E) slab directly, skip
    # these two slice ops (each is an extra XLA dispatch in this launch-bound regime).
    conved = out[:, :E].reshape(B, L, E)
    combined = out[:, E:].reshape(B, L, E)
    return conved, combined


# ------------------------- pure-JAX reference (for verification) ----------------
def encoder_reference(src, tok_emb, pos_emb, we, be, cw, cb, wh, bh):
    B, L = src.shape
    x_emb = tok_emb[src] + pos_emb[jnp.arange(L)][None, :, :]        # (B, L, E)
    h = jnp.einsum("ble,eh->blh", x_emb, we) + be                    # (B, L, H)
    for layer in range(N_LAYERS):
        hp = jnp.pad(h, ((0, 0), (PAD, PAD), (0, 0)))
        acc = jnp.zeros(h.shape[:2] + (2 * HIDDEN_DIM,), jnp.float32)
        for k in range(KERNEL_SIZE):
            acc = acc + jnp.einsum("blh,hc->blc", hp[:, k:k + L, :], cw[layer, k])
        acc = acc + cb[layer]
        a, b = acc[..., :HIDDEN_DIM], acc[..., HIDDEN_DIM:]
        glu = a * jax.nn.sigmoid(b)
        h = (glu + h) * SCALE
    conved = jnp.einsum("blh,he->ble", h, wh) + bh
    combined = (conved + x_emb) * SCALE
    return conved, combined


# -------------------------------- main -------------------------------------------
if __name__ == "__main__":
    key = jax.random.PRNGKey(0)
    keys = jax.random.split(key, 10)

    # Deterministic synthetic parameters (same shapes as the PyTorch module).
    tok_emb = jax.random.normal(keys[0], (INPUT_DIM, EMB_DIM), jnp.float32) * 0.1
    pos_emb = jax.random.normal(keys[1], (POSITION_LENGTH, EMB_DIM), jnp.float32) * 0.1
    # Linear(emb -> hidden): stored transposed so kernel does x @ W
    we = jax.random.normal(keys[2], (EMB_DIM, HIDDEN_DIM), jnp.float32) * 0.1
    be = jax.random.normal(keys[3], (1, HIDDEN_DIM), jnp.float32) * 0.1
    # Conv1d weights: torch shape (2H, H, K) -> layout (n_layers, K, H, 2H)
    conv_w_torch = jax.random.normal(
        keys[4], (N_LAYERS, 2 * HIDDEN_DIM, HIDDEN_DIM, KERNEL_SIZE), jnp.float32) * 0.1
    cw = jnp.transpose(conv_w_torch, (0, 3, 2, 1))                   # (n_layers, K, H, 2H)
    cb = jax.random.normal(keys[5], (N_LAYERS, 1, 2 * HIDDEN_DIM), jnp.float32) * 0.1
    # Linear(hidden -> emb)
    wh = jax.random.normal(keys[6], (HIDDEN_DIM, EMB_DIM), jnp.float32) * 0.1
    bh = jax.random.normal(keys[7], (1, EMB_DIM), jnp.float32) * 0.1

    # Inputs: src token ids (B, L)
    src = jax.random.randint(keys[8], (BATCH, SRC_LEN), 0, INPUT_DIM)

    ref_conved, ref_combined = encoder_reference(src, tok_emb, pos_emb,
                                                 we, be, cw, cb, wh, bh)

    # 1) f32 path — exact PyTorch (f32) forward semantics (dropout = identity).
    conved, combined = encoder_pallas(src, tok_emb, pos_emb, we, be, cw, cb, wh, bh,
                                      use_bf16=False)
    jax.block_until_ready((conved, combined))
    assert jnp.allclose(conved, ref_conved, atol=1e-5, rtol=1e-5)
    assert jnp.allclose(combined, ref_combined, atol=1e-5, rtol=1e-5)

    # 2) bf16 matmul-operand path (helps on v5e/v6e/v7x MXUs once MXU-bound; f32
    #    accumulation, f32 elementwise, f32 embedding gather) — bf16 tolerance.
    conved_bf, combined_bf = encoder_pallas(src, tok_emb, pos_emb, we, be, cw, cb, wh, bh,
                                            use_bf16=True)
    jax.block_until_ready((conved_bf, combined_bf))
    assert jnp.allclose(conved_bf, ref_conved, atol=2e-2, rtol=2e-2)
    assert jnp.allclose(combined_bf, ref_combined, atol=2e-2, rtol=2e-2)

    print("KERNEL_OK")
</pallas_src>

<mosaic_0001>
module attributes {stable_mosaic.version = 11 : i64} {
  func.func @_encoder_kernel(%arg0: i32, %arg1: memref<16x1xi32, #tpu.memory_space<vmem>>, %arg2: memref<66x32xf32, #tpu.memory_space<vmem>>, %arg3: memref<32x32xf32, #tpu.memory_space<vmem>>, %arg4: memref<1x32xf32, #tpu.memory_space<vmem>>, %arg5: memref<2x96x64xf32, #tpu.memory_space<vmem>>, %arg6: memref<2x1x64xf32, #tpu.memory_space<vmem>>, %arg7: memref<32x32xf32, #tpu.memory_space<vmem>>, %arg8: memref<1x32xf32, #tpu.memory_space<vmem>>, %arg9: memref<16x64xf32, #tpu.memory_space<vmem>>) attributes {dimension_semantics = [#tpu.dimension_semantics<arbitrary>], iteration_bounds = array<i64: 1>, scalar_prefetch = 0 : i64, scratch_operands = 0 : i64, tpu.core_type = #tpu.core_type<tc>, window_params = [{transform_indices = @transform_0, window_bounds = array<i64: 16, 1>}, {pipeline_mode = #tpu.pipeline_mode<synchronous>, transform_indices = @transform_1, window_bounds = array<i64: 66, 32>}, {pipeline_mode = #tpu.pipeline_mode<synchronous>, transform_indices = @transform_2, window_bounds = array<i64: 32, 32>}, {pipeline_mode = #tpu.pipeline_mode<synchronous>, transform_indices = @transform_3, window_bounds = array<i64: 1, 32>}, {pipeline_mode = #tpu.pipeline_mode<synchronous>, transform_indices = @transform_4, window_bounds = array<i64: 2, 96, 64>}, {pipeline_mode = #tpu.pipeline_mode<synchronous>, transform_indices = @transform_5, window_bounds = array<i64: 2, 1, 64>}, {pipeline_mode = #tpu.pipeline_mode<synchronous>, transform_indices = @transform_6, window_bounds = array<i64: 32, 32>}, {pipeline_mode = #tpu.pipeline_mode<synchronous>, transform_indices = @transform_7, window_bounds = array<i64: 1, 32>}, {transform_indices = @transform_8, window_bounds = array<i64: 16, 64>}]} {
    %c0 = arith.constant 0 : index
    %c0_0 = arith.constant 0 : index
    %0 = vector.load %arg1[%c0, %c0_0] : memref<16x1xi32, #tpu.memory_space<vmem>>, vector<16x1xi32>
    %1 = tpu.iota {dimensions = array<i32: 0>} : vector<16x1xi32>
    %c7_i32 = arith.constant 7 : i32
    %2 = vector.broadcast %c7_i32 : i32 to vector<16x1xi32>
    %3 = arith.andi %1, %2 : vector<16x1xi32>
    %4 = tpu.iota {dimensions = array<i32: 1>} : vector<16x50xi32>
    %5 = vector.broadcast %0 : vector<16x1xi32> to vector<16x50xi32>
    %6 = arith.cmpi eq, %4, %5 : vector<16x50xi32>
    %7 = arith.extui %6 : vector<16x50xi1> to vector<16x50xi32>
    %8 = arith.sitofp %7 : vector<16x50xi32> to vector<16x50xf32>
    %9 = tpu.iota {dimensions = array<i32: 1>} : vector<16x16xi32>
    %10 = vector.broadcast %3 : vector<16x1xi32> to vector<16x16xi32>
    %11 = arith.cmpi eq, %9, %10 : vector<16x16xi32>
    %12 = arith.extui %11 : vector<16x16xi1> to vector<16x16xi32>
    %13 = arith.sitofp %12 : vector<16x16xi32> to vector<16x16xf32>
    %14 = tpu.concatenate %8, %13 in 1 : vector<16x50xf32>, vector<16x16xf32> -> vector<16x66xf32>
    %c0_1 = arith.constant 0 : index
    %c0_2 = arith.constant 0 : index
    %15 = vector.load %arg2[%c0_1, %c0_2] : memref<66x32xf32, #tpu.memory_space<vmem>>, vector<66x32xf32>
    %cst = arith.constant dense<0.000000e+00> : vector<16x32xf32>
    %16 = tpu.matmul %14, %15, %cst {dimension_numbers = #tpu.dot_dimension_numbers<[1], [0], [0], [1], [0, 0, 1, 1], [], []>} : vector<16x66xf32>, vector<66x32xf32>, vector<16x32xf32> -> vector<16x32xf32>
    %c0_3 = arith.constant 0 : index
    %c0_4 = arith.constant 0 : index
    %17 = vector.load %arg3[%c0_3, %c0_4] : memref<32x32xf32, #tpu.memory_space<vmem>>, vector<32x32xf32>
    %cst_5 = arith.constant dense<0.000000e+00> : vector<16x32xf32>
    %18 = tpu.matmul %16, %17, %cst_5 {dimension_numbers = #tpu.dot_dimension_numbers<[1], [0], [0], [1], [0, 0, 1, 1], [], []>} : vector<16x32xf32>, vector<32x32xf32>, vector<16x32xf32> -> vector<16x32xf32>
    %c0_6 = arith.constant 0 : index
    %c0_7 = arith.constant 0 : index
    %19 = vector.load %arg4[%c0_6, %c0_7] : memref<1x32xf32, #tpu.memory_space<vmem>>, vector<1x32xf32>
    %20 = vector.broadcast %19 : vector<1x32xf32> to vector<16x32xf32>
    %21 = arith.addf %18, %20 : vector<16x32xf32>
    %c-1_i32 = arith.constant -1 : i32
    %22 = vector.broadcast %c-1_i32 : i32 to vector<16x1xi32>
    %23 = arith.addi %3, %22 : vector<16x1xi32>
    %c0_i32 = arith.constant 0 : i32
    %24 = vector.broadcast %c0_i32 : i32 to vector<16x1xi32>
    %25 = arith.cmpi sge, %23, %24 : vector<16x1xi32>
    %c-1_i32_8 = arith.constant -1 : i32
    %26 = vector.broadcast %c-1_i32_8 : i32 to vector<16x1xi32>
    %27 = arith.addi %3, %26 : vector<16x1xi32>
    %c8_i32 = arith.constant 8 : i32
    %28 = vector.broadcast %c8_i32 : i32 to vector<16x1xi32>
    %29 = arith.cmpi slt, %27, %28 : vector<16x1xi32>
    %30 = arith.andi %25, %29 : vector<16x1xi1>
    %31 = vector.shape_cast %30 : vector<16x1xi1> to vector<16x1xi1>
    %32 = vector.broadcast %31 : vector<16x1xi1> to vector<16x32xi1>
    %33 = arith.extui %32 : vector<16x32xi1> to vector<16x32xi32>
    %34 = arith.sitofp %33 : vector<16x32xi32> to vector<16x32xf32>
    %c1_i32 = arith.constant 1 : i32
    %35 = vector.broadcast %c1_i32 : i32 to vector<16x1xi32>
    %36 = arith.addi %3, %35 : vector<16x1xi32>
    %c0_i32_9 = arith.constant 0 : i32
    %37 = vector.broadcast %c0_i32_9 : i32 to vector<16x1xi32>
    %38 = arith.cmpi sge, %36, %37 : vector<16x1xi32>
    %c1_i32_10 = arith.constant 1 : i32
    %39 = vector.broadcast %c1_i32_10 : i32 to vector<16x1xi32>
    %40 = arith.addi %3, %39 : vector<16x1xi32>
    %c8_i32_11 = arith.constant 8 : i32
    %41 = vector.broadcast %c8_i32_11 : i32 to vector<16x1xi32>
    %42 = arith.cmpi slt, %40, %41 : vector<16x1xi32>
    %43 = arith.andi %38, %42 : vector<16x1xi1>
    %44 = vector.shape_cast %43 : vector<16x1xi1> to vector<16x1xi1>
    %45 = vector.broadcast %44 : vector<16x1xi1> to vector<16x32xi1>
    %46 = arith.extui %45 : vector<16x32xi1> to vector<16x32xi32>
    %47 = arith.sitofp %46 : vector<16x32xi32> to vector<16x32xf32>
    %c1_i32_12 = arith.constant 1 : i32
    %48 = tpu.dynamic_rotate %21 by %c1_i32_12 dim 0 : vector<16x32xf32>, i32 -> vector<16x32xf32>
    %49 = arith.mulf %48, %34 : vector<16x32xf32>
    %c15_i32 = arith.constant 15 : i32
    %50 = tpu.dynamic_rotate %21 by %c15_i32 dim 0 : vector<16x32xf32>, i32 -> vector<16x32xf32>
    %51 = arith.mulf %50, %47 : vector<16x32xf32>
    %52 = tpu.concatenate %49, %21, %51 in 1 : vector<16x32xf32>, vector<16x32xf32>, vector<16x32xf32> -> vector<16x96xf32>
    %c0_13 = arith.constant 0 : index
    %c0_14 = arith.constant 0 : index
    %c0_15 = arith.constant 0 : index
    %53 = vector.load %arg5[%c0_13, %c0_14, %c0_15] : memref<2x96x64xf32, #tpu.memory_space<vmem>>, vector<1x96x64xf32>
    %54 = vector.shape_cast %53 : vector<1x96x64xf32> to vector<96x64xf32>
    %cst_16 = arith.constant dense<0.000000e+00> : vector<16x64xf32>
    %55 = tpu.matmul %52, %54, %cst_16 {dimension_numbers = #tpu.dot_dimension_numbers<[1], [0], [0], [1], [0, 0, 1, 1], [], []>} : vector<16x96xf32>, vector<96x64xf32>, vector<16x64xf32> -> vector<16x64xf32>
    %c0_17 = arith.constant 0 : index
    %c0_18 = arith.constant 0 : index
    %c0_19 = arith.constant 0 : index
    %56 = vector.load %arg6[%c0_17, %c0_18, %c0_19] : memref<2x1x64xf32, #tpu.memory_space<vmem>>, vector<1x1x64xf32>
    %57 = vector.shape_cast %56 : vector<1x1x64xf32> to vector<1x64xf32>
    %58 = vector.broadcast %57 : vector<1x64xf32> to vector<16x64xf32>
    %59 = arith.addf %55, %58 : vector<16x64xf32>
    %60 = vector.extract_strided_slice %59 {offsets = [0, 0], sizes = [16, 32], strides = [1, 1]} : vector<16x64xf32> to vector<16x32xf32>
    %61 = vector.extract_strided_slice %59 {offsets = [0, 32], sizes = [16, 32], strides = [1, 1]} : vector<16x64xf32> to vector<16x32xf32>
    %62 = arith.negf %61 : vector<16x32xf32>
    %63 = math.exp %62 : vector<16x32xf32>
    %cst_20 = arith.constant 1.000000e+00 : f32
    %64 = vector.broadcast %cst_20 : f32 to vector<16x32xf32>
    %65 = arith.addf %64, %63 : vector<16x32xf32>
    %66 = arith.divf %64, %65 : vector<16x32xf32>
    %67 = arith.mulf %60, %66 : vector<16x32xf32>
    %68 = arith.addf %67, %21 : vector<16x32xf32>
    %cst_21 = arith.constant 0.707106769 : f32
    %69 = vector.broadcast %cst_21 : f32 to vector<16x32xf32>
    %70 = arith.mulf %68, %69 : vector<16x32xf32>
    %c1_i32_22 = arith.constant 1 : i32
    %71 = tpu.dynamic_rotate %70 by %c1_i32_22 dim 0 : vector<16x32xf32>, i32 -> vector<16x32xf32>
    %72 = arith.mulf %71, %34 : vector<16x32xf32>
    %c15_i32_23 = arith.constant 15 : i32
    %73 = tpu.dynamic_rotate %70 by %c15_i32_23 dim 0 : vector<16x32xf32>, i32 -> vector<16x32xf32>
    %74 = arith.mulf %73, %47 : vector<16x32xf32>
    %75 = tpu.concatenate %72, %70, %74 in 1 : vector<16x32xf32>, vector<16x32xf32>, vector<16x32xf32> -> vector<16x96xf32>
    %c1 = arith.constant 1 : index
    %c0_24 = arith.constant 0 : index
    %c0_25 = arith.constant 0 : index
    %76 = vector.load %arg5[%c1, %c0_24, %c0_25] : memref<2x96x64xf32, #tpu.memory_space<vmem>>, vector<1x96x64xf32>
    %77 = vector.shape_cast %76 : vector<1x96x64xf32> to vector<96x64xf32>
    %cst_26 = arith.constant dense<0.000000e+00> : vector<16x64xf32>
    %78 = tpu.matmul %75, %77, %cst_26 {dimension_numbers = #tpu.dot_dimension_numbers<[1], [0], [0], [1], [0, 0, 1, 1], [], []>} : vector<16x96xf32>, vector<96x64xf32>, vector<16x64xf32> -> vector<16x64xf32>
    %c1_27 = arith.constant 1 : index
    %c0_28 = arith.constant 0 : index
    %c0_29 = arith.constant 0 : index
    %79 = vector.load %arg6[%c1_27, %c0_28, %c0_29] : memref<2x1x64xf32, #tpu.memory_space<vmem>>, vector<1x1x64xf32>
    %80 = vector.shape_cast %79 : vector<1x1x64xf32> to vector<1x64xf32>
    %81 = vector.broadcast %80 : vector<1x64xf32> to vector<16x64xf32>
    %82 = arith.addf %78, %81 : vector<16x64xf32>
    %83 = vector.extract_strided_slice %82 {offsets = [0, 0], sizes = [16, 32], strides = [1, 1]} : vector<16x64xf32> to vector<16x32xf32>
    %84 = vector.extract_strided_slice %82 {offsets = [0, 32], sizes = [16, 32], strides = [1, 1]} : vector<16x64xf32> to vector<16x32xf32>
    %85 = arith.negf %84 : vector<16x32xf32>
    %86 = math.exp %85 : vector<16x32xf32>
    %cst_30 = arith.constant 1.000000e+00 : f32
    %87 = vector.broadcast %cst_30 : f32 to vector<16x32xf32>
    %88 = arith.addf %87, %86 : vector<16x32xf32>
    %89 = arith.divf %87, %88 : vector<16x32xf32>
    %90 = arith.mulf %83, %89 : vector<16x32xf32>
    %91 = arith.addf %90, %70 : vector<16x32xf32>
    %cst_31 = arith.constant 0.707106769 : f32
    %92 = vector.broadcast %cst_31 : f32 to vector<16x32xf32>
    %93 = arith.mulf %91, %92 : vector<16x32xf32>
    %c0_32 = arith.constant 0 : index
    %c0_33 = arith.constant 0 : index
    %94 = vector.load %arg7[%c0_32, %c0_33] : memref<32x32xf32, #tpu.memory_space<vmem>>, vector<32x32xf32>
    %cst_34 = arith.constant dense<0.000000e+00> : vector<16x32xf32>
    %95 = tpu.matmul %93, %94, %cst_34 {dimension_numbers = #tpu.dot_dimension_numbers<[1], [0], [0], [1], [0, 0, 1, 1], [], []>} : vector<16x32xf32>, vector<32x32xf32>, vector<16x32xf32> -> vector<16x32xf32>
    %c0_35 = arith.constant 0 : index
    %c0_36 = arith.constant 0 : index
    %96 = vector.load %arg8[%c0_35, %c0_36] : memref<1x32xf32, #tpu.memory_space<vmem>>, vector<1x32xf32>
    %97 = vector.broadcast %96 : vector<1x32xf32> to vector<16x32xf32>
    %98 = arith.addf %95, %97 : vector<16x32xf32>
    %99 = arith.addf %98, %16 : vector<16x32xf32>
    %cst_37 = arith.constant 0.707106769 : f32
    %100 = vector.broadcast %cst_37 : f32 to vector<16x32xf32>
    %101 = arith.mulf %99, %100 : vector<16x32xf32>
    %102 = tpu.concatenate %98, %101 in 1 : vector<16x32xf32>, vector<16x32xf32> -> vector<16x64xf32>
    %c0_38 = arith.constant 0 : index
    %c0_39 = arith.constant 0 : index
    %103 = vector.load %arg9[%c0_38, %c0_39] : memref<16x64xf32, #tpu.memory_space<vmem>>, vector<16x64xf32>
    tpu.vector_store %arg9[%c0_38, %c0_39], %102 {strides = array<i32>} : memref<16x64xf32, #tpu.memory_space<vmem>>, vector<16x64xf32>,
    return
  }
  func.func @transform_0(%arg0: i32) -> (i32, i32) {
    %c0_i32 = arith.constant 0 : i32
    %c0_i32_0 = arith.constant 0 : i32
    return %arg0, %c0_i32 : i32, i32
  }
  func.func @transform_1(%arg0: i32) -> (i32, i32) {
    %c0_i32 = arith.constant 0 : i32
    %c0_i32_0 = arith.constant 0 : i32
    %c0_i32_1 = arith.constant 0 : i32
    return %c0_i32, %c0_i32_0 : i32, i32
  }
  func.func @transform_2(%arg0: i32) -> (i32, i32) {
    %c0_i32 = arith.constant 0 : i32
    %c0_i32_0 = arith.constant 0 : i32
    %c0_i32_1 = arith.constant 0 : i32
    return %c0_i32, %c0_i32_0 : i32, i32
  }
  func.func @transform_3(%arg0: i32) -> (i32, i32) {
    %c0_i32 = arith.constant 0 : i32
    %c0_i32_0 = arith.constant 0 : i32
    %c0_i32_1 = arith.constant 0 : i32
    return %c0_i32, %c0_i32_0 : i32, i32
  }
  func.func @transform_4(%arg0: i32) -> (i32, i32, i32) {
    %c0_i32 = arith.constant 0 : i32
    %c0_i32_0 = arith.constant 0 : i32
    %c0_i32_1 = arith.constant 0 : i32
    %c0_i32_2 = arith.constant 0 : i32
    return %c0_i32, %c0_i32_0, %c0_i32_1 : i32, i32, i32
  }
  func.func @transform_5(%arg0: i32) -> (i32, i32, i32) {
    %c0_i32 = arith.constant 0 : i32
    %c0_i32_0 = arith.constant 0 : i32
    %c0_i32_1 = arith.constant 0 : i32
    %c0_i32_2 = arith.constant 0 : i32
    return %c0_i32, %c0_i32_0, %c0_i32_1 : i32, i32, i32
  }
  func.func @transform_6(%arg0: i32) -> (i32, i32) {
    %c0_i32 = arith.constant 0 : i32
    %c0_i32_0 = arith.constant 0 : i32
    %c0_i32_1 = arith.constant 0 : i32
    return %c0_i32, %c0_i32_0 : i32, i32
  }
  func.func @transform_7(%arg0: i32) -> (i32, i32) {
    %c0_i32 = arith.constant 0 : i32
    %c0_i32_0 = arith.constant 0 : i32
    %c0_i32_1 = arith.constant 0 : i32
    return %c0_i32, %c0_i32_0 : i32, i32
  }
  func.func @transform_8(%arg0: i32) -> (i32, i32) {
    %c0_i32 = arith.constant 0 : i32
    %c0_i32_0 = arith.constant 0 : i32
    return %arg0, %c0_i32 : i32, i32
  }
}

</mosaic_0001>

<llo_original>
// kernel: tpu_custom_call.1
$region0: #{tpu_custom_call.1}
  #allocation0 [shape = 'u32[]', space=smem, size = 0x4, offset = 0x4, fixed_abs, tag = 'smem constant byte address 0x4 - core index']
  #allocation1 [shape = 'u32[144,128]{1,0:T(1,128)}', space=vmem, size = 0x12000, scoped, tag = 'internal scratch']
  %s0 = inlined_call_operand.vmem [shape: s32[16,1], index: 0, kind: input, shape index: {}]
  %s1 = inlined_call_operand.vmem [shape: f32[66,32], index: 1, kind: input, shape index: {}]
  %s2 = inlined_call_operand.vmem [shape: f32[32,32], index: 2, kind: input, shape index: {}]
  %s3 = inlined_call_operand.vmem [shape: f32[1,32], index: 3, kind: input, shape index: {}]
  %s4 = inlined_call_operand.vmem [shape: f32[2,96,64], index: 4, kind: input, shape index: {}]
  %s5 = inlined_call_operand.vmem [shape: f32[2,1,64], index: 5, kind: input, shape index: {}]
  %s6 = inlined_call_operand.vmem [shape: f32[32,32], index: 6, kind: input, shape index: {}]
  %s7 = inlined_call_operand.vmem [shape: f32[1,32], index: 7, kind: input, shape index: {}]
  %s8 = inlined_call_operand.hbm [shape: f32[16,64], index: 8, kind: output, shape index: {}]
  %s9 = sld [smem:[#allocation0]]
  $region42: #{tpu_custom_call.1} parent=0
    _
  %s11 = ssub.s32 1, %s9
  %s12 = scalar_select 0, %s11, %s9
  $region1: #{tpu_custom_call.1} parent=0
    #allocation2 [shape = 'u8[8192]{0}', space=vmem, size = 0x2000, scoped, tag = 'output window, operand 0, single buffered']
    #allocation3 [shape = 's32[1]{0}', space=sflag, size = 0x4, scoped, tag = 'scoped memory for tpu_custom_call.1']
    %13 = vsyncpa [#allocation3], 0
    // Predicated region
    $region2: #{tpu_custom_call.1} parent=1 // pred_check
      _
    $region3: #{tpu_custom_call.1} parent=1 // pred_check_branch
      %15 = sbr.rel (0) target = $region5
    $region4: #{tpu_custom_call.1} parent=1 // pred_region
      _
    $region5: #{tpu_custom_call.1} parent=1 // pred_fallthru
      _
    // Predicated region
    $region6: #{tpu_custom_call.1} parent=1 // pred_check
      _
    $region7: #{tpu_custom_call.1} parent=1 // pred_check_branch
      %17 = sbr.rel (0) target = $region9
    $region8: #{tpu_custom_call.1} parent=1 // pred_region
      _
    $region9: #{tpu_custom_call.1} parent=1 // pred_fallthru
      _
    // Predicated region
    $region10: #{tpu_custom_call.1} parent=1 // pred_check
      _
    $region11: #{tpu_custom_call.1} parent=1 // pred_check_branch
      %19 = sbr.rel (0) target = $region13
    $region12: #{tpu_custom_call.1} parent=1 // pred_region
      _
    $region13: #{tpu_custom_call.1} parent=1 // pred_fallthru
      _
    // Predicated region
    $region14: #{tpu_custom_call.1} parent=1 // pred_check
      _
    $region15: #{tpu_custom_call.1} parent=1 // pred_check_branch
      %21 = sbr.rel (0) target = $region17
    $region16: #{tpu_custom_call.1} parent=1 // pred_region
      _
    $region17: #{tpu_custom_call.1} parent=1 // pred_fallthru
      _
    // Predicated region
    $region18: #{tpu_custom_call.1} parent=1 // pred_check
      _
    $region19: #{tpu_custom_call.1} parent=1 // pred_check_branch
      %23 = sbr.rel (0) target = $region21
    $region20: #{tpu_custom_call.1} parent=1 // pred_region
      _
    $region21: #{tpu_custom_call.1} parent=1 // pred_fallthru
      _
    // Predicated region
    $region22: #{tpu_custom_call.1} parent=1 // pred_check
      _
    $region23: #{tpu_custom_call.1} parent=1 // pred_check_branch
      %25 = sbr.rel (0) target = $region25
    $region24: #{tpu_custom_call.1} parent=1 // pred_region
      _
    $region25: #{tpu_custom_call.1} parent=1 // pred_fallthru
      _
    // Predicated region
    $region26: #{tpu_custom_call.1} parent=1 // pred_check
      _
    $region27: #{tpu_custom_call.1} parent=1 // pred_check_branch
      %27 = sbr.rel (0) target = $region29
    $region28: #{tpu_custom_call.1} parent=1 // pred_region
      _
    $region29: #{tpu_custom_call.1} parent=1 // pred_fallthru
      _
    // Predicated region
    $region30: #{tpu_custom_call.1} parent=1 // pred_check
      _
    $region31: #{tpu_custom_call.1} parent=1 // pred_check_branch
      %29 = sbr.rel (0) target = $region33
    $region32: #{tpu_custom_call.1} parent=1 // pred_region
      _
    $region33: #{tpu_custom_call.1} parent=1 // pred_fallthru
      _
    %v30 = vld [vmem:[%s0] sm:$0xff]
    %v31 = vld [vmem:[%s0 + $0x8] sm:$0xff]
    %v32 = vlaneseq
    %v33 = vshrl.u32 %v32, 7
    %v34 = vadd.s32 %v33, 8
    %v35 = vand.u32 %v33, 7
    %v36 = vand.u32 %v34, 7
    %v37 = vlaneseq
    %v38 = vand.u32 %v37, 127
    %39 = vset.pattern.permute.xlu0 0
    %40 = vperm.xlu0 %39, %v30
    %v41 = vpop.permute.xlu0 %40
    %42 = vset.pattern.permute.xlu0 0
    %43 = vperm.xlu0 %42, %v31
    %v44 = vpop.permute.xlu0 %43
    %vm45 = vcmp.eq.s32.totalorder %v38, %v41
    %vm46 = vcmp.eq.s32.totalorder %v38, %v44
    %v47 = vsel %vm45, 1, 0
    %v48 = vsel %vm46, 1, 0
    %v49 = vcvt.s32.f32 %v47
    %v50 = vcvt.s32.f32 %v48
    %vm51 = vcmp.eq.s32.totalorder %v38, %v35
    %vm52 = vcmp.eq.s32.totalorder %v38, %v36
    %v53 = vsel %vm51, 1, 0
    %v54 = vsel %vm52, 1, 0
    %v55 = vcvt.s32.f32 %v53
    %v56 = vcvt.s32.f32 %v54
    %59 = vrot.lane.b32.xlu0 %v55, 50
    %v60 = vpop.permute.xlu0 %59
    %61 = vrot.lane.b32.xlu0 %v56, 50
    %v62 = vpop.permute.xlu0 %61
    %vm65 = vcmask 408576
    %v66 = vsel %vm65, %v49, %v60
    %v67 = vsel %vm65, %v50, %v62
    %v68 = vld [vmem:[%s1] sm:$0xff]
    %v69 = vld [vmem:[%s1 + $0x8] sm:$0xff]
    %v70 = vld [vmem:[%s1 + $0x10] sm:$0xff]
    %v71 = vld [vmem:[%s1 + $0x18] sm:$0xff]
    %v72 = vld [vmem:[%s1 + $0x20] sm:$0xff]
    %v73 = vld [vmem:[%s1 + $0x28] sm:$0xff]
    %v74 = vld [vmem:[%s1 + $0x30] sm:$0xff]
    %v75 = vld [vmem:[%s1 + $0x38] sm:$0xff]
    %v76 = vld [vmem:[%s1 + $0x40] sm:$0x3]
    %vm77 = vcmask 539648
    %v79 = vsel %vm77, %v66, 0
    %v82 = vsel %vm77, %v67, 0
    %vm84 = vcmask 1041408
    %v86 = vsel %vm84, %v76, 0
    %88 = vmatprep.subr.mxu0 0.0
    %89 = vmatpush1.msra.mxu0 0.0
    %90 = vmatprep.subr.mxu0 0.0
    %91 = vmatpush1.msra.mxu0 0.0
    %92 = vmatprep.subr.mxu0 0.0
    %93 = vmatpush1.msra.mxu0 0.0
    %94 = vmatprep.subr.mxu0 0.0
    %95 = vmatpush1.msra.mxu0 0.0
    %96 = vmatprep.subr.mxu0 0.0
    %97 = vmatpush1.msra.mxu0 0.0
    %98 = vmatprep.subr.mxu0 0.0
    %99 = vmatpush1.msra.mxu0 0.0
    %100 = vmatprep.subr.mxu0 0.0
    %101 = vmatpush1.msra.mxu0 0.0
    %102 = vmatprep.subr.mxu0 0.0
    %103 = vmatpush1.msra.mxu0 %v86
    %104 = vmatprep.subr.mxu0 0.0
    %105 = vmatpush1.msra.mxu0 %v75
    %106 = vmatprep.subr.mxu0 0.0
    %107 = vmatpush1.msra.mxu0 %v74
    %108 = vmatprep.subr.mxu0 0.0
    %109 = vmatpush1.msra.mxu0 %v73
    %110 = vmatprep.subr.mxu0 0.0
    %111 = vmatpush1.msra.mxu0 %v72
    %112 = vmatprep.subr.mxu0 0.0
    %113 = vmatpush1.msra.mxu0 %v71
    %114 = vmatprep.subr.mxu0 0.0
    %115 = vmatpush1.msra.mxu0 %v70
    %116 = vmatprep.subr.mxu0 0.0
    %117 = vmatpush1.msra.mxu0 %v69
    %118 = vmatprep.subr.mxu0 0.0
    %119 = vmatpush1.msra.mxu0 %v68
    %120 = vmatprep.subr.mxu0 0.0
    %121 = vmatpush2.msra.mxu0 0.0
    %122 = vmatprep.subr.mxu0 0.0
    %123 = vmatpush2.msra.mxu0 0.0
    %124 = vmatprep.subr.mxu0 0.0
    %125 = vmatpush2.msra.mxu0 0.0
    %126 = vmatprep.subr.mxu0 0.0
    %127 = vmatpush2.msra.mxu0 0.0
    %128 = vmatprep.subr.mxu0 0.0
    %129 = vmatpush2.msra.mxu0 0.0
    %130 = vmatprep.subr.mxu0 0.0
    %131 = vmatpush2.msra.mxu0 0.0
    %132 = vmatprep.subr.mxu0 0.0
    %133 = vmatpush2.msra.mxu0 0.0
    %134 = vmatprep.subr.mxu0 0.0
    %135 = vmatpush2.msra.mxu0 0.0
    %136 = vmatprep.subr.mxu0 0.0
    %137 = vmatpush2.msra.mxu0 0.0
    %138 = vmatprep.subr.mxu0 0.0
    %139 = vmatpush2.msra.mxu0 0.0
    %140 = vmatprep.subr.mxu0 0.0
    %141 = vmatpush2.msra.mxu0 0.0
    %142 = vmatprep.subr.mxu0 0.0
    %143 = vmatpush2.msra.mxu0 0.0
    %144 = vmatprep.subr.mxu0 0.0
    %145 = vmatpush2.msra.mxu0 0.0
    %146 = vmatprep.subr.mxu0 0.0
    %147 = vmatpush2.msra.mxu0 0.0
    %148 = vmatprep.subr.mxu0 0.0
    %149 = vmatpush2.msra.mxu0 0.0
    %150 = vmatprep.subr.mxu0 0.0
    %151 = vmatpush2.msra.mxu0 0.0
    %152 = vmatprep.mubr.f32.mxu0 0.0
    %153 = vmatmul.mubr.f32.gmra.mxu0 %v79
    %v154 = vpop.f32.mrf.mxu0
    %v155 = vadd.f32 0.0, %v154
    %v156 = vpop.f32.mrf.mxu0
    %157 = vmatprep.mubr.f32.mxu0 0.0
    %158 = vmatmul.mubr.f32.gmra.mxu0 %v82
    %v159 = vpop.f32.mrf.mxu0
    %v160 = vadd.f32 0.0, %v159
    %v161 = vpop.f32.mrf.mxu0
    %162 = vdwg.mxu0
    %v163 = vld [vmem:[%s2] sm:$0xff]
    %v164 = vld [vmem:[%s2 + $0x8] sm:$0xff]
    %v165 = vld [vmem:[%s2 + $0x10] sm:$0xff]
    %v166 = vld [vmem:[%s2 + $0x18] sm:$0xff]
    %v167 = vld [vmem:[%s3] sm:$0x1]
    %v169 = vlaneseq
    %v170 = vshrl.u32 %v169, 7
    %v171 = vsub.s32 0, %v170
    %v172 = vrot.slane %v167, %v171
    %vm174 = vcmask 261120
    %v176 = vsel %vm174, %v155, 0
    %v179 = vsel %vm174, %v160, 0
    %181 = vmatprep.subr.mxu0 0.0
    %182 = vmatpush1.msra.mxu0 0.0
    %183 = vmatprep.subr.mxu0 0.0
    %184 = vmatpush1.msra.mxu0 0.0
    %185 = vmatprep.subr.mxu0 0.0
    %186 = vmatpush1.msra.mxu0 0.0
    %187 = vmatprep.subr.mxu0 0.0
    %188 = vmatpush1.msra.mxu0 0.0
    %189 = vmatprep.subr.mxu0 0.0
    %190 = vmatpush1.msra.mxu0 0.0
    %191 = vmatprep.subr.mxu0 0.0
    %192 = vmatpush1.msra.mxu0 0.0
    %193 = vmatprep.subr.mxu0 0.0
    %194 = vmatpush1.msra.mxu0 0.0
    %195 = vmatprep.subr.mxu0 0.0
    %196 = vmatpush1.msra.mxu0 0.0
    %197 = vmatprep.subr.mxu0 0.0
    %198 = vmatpush1.msra.mxu0 0.0
    %199 = vmatprep.subr.mxu0 0.0
    %200 = vmatpush1.msra.mxu0 0.0
    %201 = vmatprep.subr.mxu0 0.0
    %202 = vmatpush1.msra.mxu0 0.0
    %203 = vmatprep.subr.mxu0 0.0
    %204 = vmatpush1.msra.mxu0 0.0
    %205 = vmatprep.subr.mxu0 0.0
    %206 = vmatpush1.msra.mxu0 %v166
    %207 = vmatprep.subr.mxu0 0.0
    %208 = vmatpush1.msra.mxu0 %v165
    %209 = vmatprep.subr.mxu0 0.0
    %210 = vmatpush1.msra.mxu0 %v164
    %211 = vmatprep.subr.mxu0 0.0
    %212 = vmatpush1.msra.mxu0 %v163
    %213 = vmatprep.subr.mxu0 0.0
    %214 = vmatpush2.msra.mxu0 0.0
    %215 = vmatprep.subr.mxu0 0.0
    %216 = vmatpush2.msra.mxu0 0.0
    %217 = vmatprep.subr.mxu0 0.0
    %218 = vmatpush2.msra.mxu0 0.0
    %219 = vmatprep.subr.mxu0 0.0
    %220 = vmatpush2.msra.mxu0 0.0
    %221 = vmatprep.subr.mxu0 0.0
    %222 = vmatpush2.msra.mxu0 0.0
    %223 = vmatprep.subr.mxu0 0.0
    %224 = vmatpush2.msra.mxu0 0.0
    %225 = vmatprep.subr.mxu0 0.0
    %226 = vmatpush2.msra.mxu0 0.0
    %227 = vmatprep.subr.mxu0 0.0
    %228 = vmatpush2.msra.mxu0 0.0
    %229 = vmatprep.subr.mxu0 0.0
    %230 = vmatpush2.msra.mxu0 0.0
    %231 = vmatprep.subr.mxu0 0.0
    %232 = vmatpush2.msra.mxu0 0.0
    %233 = vmatprep.subr.mxu0 0.0
    %234 = vmatpush2.msra.mxu0 0.0
    %235 = vmatprep.subr.mxu0 0.0
    %236 = vmatpush2.msra.mxu0 0.0
    %237 = vmatprep.subr.mxu0 0.0
    %238 = vmatpush2.msra.mxu0 0.0
    %239 = vmatprep.subr.mxu0 0.0
    %240 = vmatpush2.msra.mxu0 0.0
    %241 = vmatprep.subr.mxu0 0.0
    %242 = vmatpush2.msra.mxu0 0.0
    %243 = vmatprep.subr.mxu0 0.0
    %244 = vmatpush2.msra.mxu0 0.0
    %245 = vmatprep.mubr.f32.mxu0 0.0
    %246 = vmatmul.mubr.f32.gmra.mxu0 %v176
    %v247 = vpop.f32.mrf.mxu0
    %v248 = vadd.f32 %v172, %v247
    %v249 = vpop.f32.mrf.mxu0
    %250 = vmatprep.mubr.f32.mxu0 0.0
    %251 = vmatmul.mubr.f32.gmra.mxu0 %v179
    %v252 = vpop.f32.mrf.mxu0
    %v253 = vadd.f32 %v172, %v252
    %v254 = vpop.f32.mrf.mxu0
    %255 = vdwg.mxu0
    %v256 = vadd.s32 %v35, 4294967295
    %v257 = vadd.s32 %v36, 4294967295
    %vm258 = vcmp.ge.s32.totalorder %v256, 0
    %vm259 = vcmp.ge.s32.totalorder %v257, 0
    %vm260 = vcmp.lt.s32.totalorder %v256, 8
    %vm261 = vcmp.lt.s32.totalorder %v257, 8
    %vm262 = vmand %vm258, %vm260
    %vm263 = vmand %vm259, %vm261
    %v264 = vsel %vm262, 1, 0
    %v265 = vsel %vm263, 1, 0
    %vm266 = vcmp.eq.s32.totalorder %v264, 1
    %vm267 = vcmp.eq.s32.totalorder %v265, 1
    %v268 = vsel %vm266, 1, 0
    %v269 = vsel %vm267, 1, 0
    %v270 = vcvt.s32.f32 %v268
    %v271 = vcvt.s32.f32 %v269
    %v272 = vadd.s32 %v35, 1
    %v273 = vadd.s32 %v36, 1
    %vm274 = vcmp.ge.s32.totalorder %v272, 0
    %vm275 = vcmp.ge.s32.totalorder %v273, 0
    %vm276 = vcmp.lt.s32.totalorder %v272, 8
    %vm277 = vcmp.lt.s32.totalorder %v273, 8
    %vm278 = vmand %vm274, %vm276
    %vm279 = vmand %vm275, %vm277
    %v280 = vsel %vm278, 1, 0
    %v281 = vsel %vm279, 1, 0
    %vm282 = vcmp.eq.s32.totalorder %v280, 1
    %vm283 = vcmp.eq.s32.totalorder %v281, 1
    %v284 = vsel %vm282, 1, 0
    %v285 = vsel %vm283, 1, 0
    %v286 = vcvt.s32.f32 %v284
    %v287 = vcvt.s32.f32 %v285
    %v288 = vrot.slane %v248, 7
    %v289 = vrot.slane %v253, 7
    %vm290 = vcmp.lt.s32.totalorder %v33, 1
    %v291 = vsel %vm290, %v288, %v289
    %v292 = vsel %vm290, %v289, %v288
    %v293 = vmul.f32 %v292, %v270
    %v294 = vmul.f32 %v291, %v271
    %v295 = vrot.slane %v248, 1
    %v296 = vrot.slane %v253, 1
    %vm297 = vcmp.lt.s32.totalorder %v33, 7
    %v298 = vsel %vm297, %v295, %v296
    %v299 = vsel %vm297, %v296, %v295
    %v300 = vmul.f32 %v298, %v286
    %v301 = vmul.f32 %v299, %v287
    %304 = vrot.lane.b32.xlu0 %v248, 32
    %v305 = vpop.permute.xlu0 %304
    %306 = vrot.lane.b32.xlu0 %v253, 32
    %v307 = vpop.permute.xlu0 %306
    %312 = vrot.lane.b32.xlu0 %v300, 64
    %v313 = vpop.permute.xlu0 %312
    %314 = vrot.lane.b32.xlu0 %v301, 64
    %v315 = vpop.permute.xlu0 %314
    %v318 = vsel %vm174, %v293, %v305
    %v319 = vsel %vm174, %v294, %v307
    %vm320 = vcmask 523264
    %v321 = vsel %vm320, %v318, %v313
    %v322 = vsel %vm320, %v319, %v315
    %v323 = vld [vmem:[%s4] sm:$0xff]
    %v324 = vld [vmem:[%s4 + $0x8] sm:$0xff]
    %v325 = vld [vmem:[%s4 + $0x10] sm:$0xff]
    %v326 = vld [vmem:[%s4 + $0x18] sm:$0xff]
    %v327 = vld [vmem:[%s4 + $0x20] sm:$0xff]
    %v328 = vld [vmem:[%s4 + $0x28] sm:$0xff]
    %v329 = vld [vmem:[%s4 + $0x30] sm:$0xff]
    %v330 = vld [vmem:[%s4 + $0x38] sm:$0xff]
    %v331 = vld [vmem:[%s4 + $0x40] sm:$0xff]
    %v332 = vld [vmem:[%s4 + $0x48] sm:$0xff]
    %v333 = vld [vmem:[%s4 + $0x50] sm:$0xff]
    %v334 = vld [vmem:[%s4 + $0x58] sm:$0xff]
    %v335 = vld [vmem:[%s5] sm:$0x1]
    %v337 = vlaneseq
    %v338 = vshrl.u32 %v337, 7
    %v339 = vsub.s32 0, %v338
    %v340 = vrot.slane %v335, %v339
    %vm342 = vcmask 785408
    %v344 = vsel %vm342, %v321, 0
    %v347 = vsel %vm342, %v322, 0
    %349 = vmatprep.subr.mxu0 0.0
    %350 = vmatpush1.msra.mxu0 0.0
    %351 = vmatprep.subr.mxu0 0.0
    %352 = vmatpush1.msra.mxu0 0.0
    %353 = vmatprep.subr.mxu0 0.0
    %354 = vmatpush1.msra.mxu0 0.0
    %355 = vmatprep.subr.mxu0 0.0
    %356 = vmatpush1.msra.mxu0 0.0
    %357 = vmatprep.subr.mxu0 0.0
    %358 = vmatpush1.msra.mxu0 %v334
    %359 = vmatprep.subr.mxu0 0.0
    %360 = vmatpush1.msra.mxu0 %v333
    %361 = vmatprep.subr.mxu0 0.0
    %362 = vmatpush1.msra.mxu0 %v332
    %363 = vmatprep.subr.mxu0 0.0
    %364 = vmatpush1.msra.mxu0 %v331
    %365 = vmatprep.subr.mxu0 0.0
    %366 = vmatpush1.msra.mxu0 %v330
    %367 = vmatprep.subr.mxu0 0.0
    %368 = vmatpush1.msra.mxu0 %v329
    %369 = vmatprep.subr.mxu0 0.0
    %370 = vmatpush1.msra.mxu0 %v328
    %371 = vmatprep.subr.mxu0 0.0
    %372 = vmatpush1.msra.mxu0 %v327
    %373 = vmatprep.subr.mxu0 0.0
    %374 = vmatpush1.msra.mxu0 %v326
    %375 = vmatprep.subr.mxu0 0.0
    %376 = vmatpush1.msra.mxu0 %v325
    %377 = vmatprep.subr.mxu0 0.0
    %378 = vmatpush1.msra.mxu0 %v324
    %379 = vmatprep.subr.mxu0 0.0
    %380 = vmatpush1.msra.mxu0 %v323
    %381 = vmatprep.subr.mxu0 0.0
    %382 = vmatpush2.msra.mxu0 0.0
    %383 = vmatprep.subr.mxu0 0.0
    %384 = vmatpush2.msra.mxu0 0.0
    %385 = vmatprep.subr.mxu0 0.0
    %386 = vmatpush2.msra.mxu0 0.0
    %387 = vmatprep.subr.mxu0 0.0
    %388 = vmatpush2.msra.mxu0 0.0
    %389 = vmatprep.subr.mxu0 0.0
    %390 = vmatpush2.msra.mxu0 0.0
    %391 = vmatprep.subr.mxu0 0.0
    %392 = vmatpush2.msra.mxu0 0.0
    %393 = vmatprep.subr.mxu0 0.0
    %394 = vmatpush2.msra.mxu0 0.0
    %395 = vmatprep.subr.mxu0 0.0
    %396 = vmatpush2.msra.mxu0 0.0
    %397 = vmatprep.subr.mxu0 0.0
    %398 = vmatpush2.msra.mxu0 0.0
    %399 = vmatprep.subr.mxu0 0.0
    %400 = vmatpush2.msra.mxu0 0.0
    %401 = vmatprep.subr.mxu0 0.0
    %402 = vmatpush2.msra.mxu0 0.0
    %403 = vmatprep.subr.mxu0 0.0
    %404 = vmatpush2.msra.mxu0 0.0
    %405 = vmatprep.subr.mxu0 0.0
    %406 = vmatpush2.msra.mxu0 0.0
    %407 = vmatprep.subr.mxu0 0.0
    %408 = vmatpush2.msra.mxu0 0.0
    %409 = vmatprep.subr.mxu0 0.0
    %410 = vmatpush2.msra.mxu0 0.0
    %411 = vmatprep.subr.mxu0 0.0
    %412 = vmatpush2.msra.mxu0 0.0
    %413 = vmatprep.mubr.f32.mxu0 0.0
    %414 = vmatmul.mubr.f32.gmra.mxu0 %v344
    %v415 = vpop.f32.mrf.mxu0
    %v416 = vadd.f32 %v340, %v415
    %v417 = vpop.f32.mrf.mxu0
    %418 = vmatprep.mubr.f32.mxu0 0.0
    %419 = vmatmul.mubr.f32.gmra.mxu0 %v347
    %v420 = vpop.f32.mrf.mxu0
    %v421 = vadd.f32 %v340, %v420
    %v422 = vpop.f32.mrf.mxu0
    %423 = vdwg.mxu0
    %v424 = vxor.u32 %v416, 2147483648
    %v425 = vxor.u32 %v421, 2147483648
    %v426 = vmul.f32 %v424, 1.442695
    %v427 = vpow.pop %v426
    %v428 = vmul.f32 %v425, 1.442695
    %v429 = vpow.pop %v428
    %v430 = vadd.f32 %v427, 1.0
    %v431 = vadd.f32 %v429, 1.0
    %v432 = vrcp.pop %v430
    %v433 = vmul.f32 1.0, %v432
    %v434 = vrcp.pop %v431
    %v435 = vmul.f32 1.0, %v434
    %438 = vrot.lane.b32.xlu0 %v433, 96
    %v439 = vpop.permute.xlu0 %438
    %440 = vrot.lane.b32.xlu0 %v435, 96
    %v441 = vpop.permute.xlu0 %440
    %v444 = vmul.f32 %v416, %v439
    %v445 = vmul.f32 %v421, %v441
    %v446 = vadd.f32 %v444, %v248
    %v447 = vadd.f32 %v445, %v253
    %v448 = vmul.f32 %v446, 0.70710677
    %v449 = vmul.f32 %v447, 0.70710677
    %v450 = vrot.slane %v448, 7
    %v451 = vrot.slane %v449, 7
    %v452 = vsel %vm290, %v450, %v451
    %v453 = vsel %vm290, %v451, %v450
    %v454 = vmul.f32 %v453, %v270
    %v455 = vmul.f32 %v452, %v271
    %v456 = vrot.slane %v448, 1
    %v457 = vrot.slane %v449, 1
    %v458 = vsel %vm297, %v456, %v457
    %v459 = vsel %vm297, %v457, %v456
    %v460 = vmul.f32 %v458, %v286
    %v461 = vmul.f32 %v459, %v287
    %464 = vrot.lane.b32.xlu0 %v448, 32
    %v465 = vpop.permute.xlu0 %464
    %466 = vrot.lane.b32.xlu0 %v449, 32
    %v467 = vpop.permute.xlu0 %466
    %472 = vrot.lane.b32.xlu0 %v460, 64
    %v473 = vpop.permute.xlu0 %472
    %474 = vrot.lane.b32.xlu0 %v461, 64
    %v475 = vpop.permute.xlu0 %474
    %v478 = vsel %vm174, %v454, %v465
    %v479 = vsel %vm174, %v455, %v467
    %v480 = vsel %vm320, %v478, %v473
    %v481 = vsel %vm320, %v479, %v475
    %s482 = scalar_lea.vmem %s4, 96
    %v483 = vld [vmem:[%s482] sm:$0xff]
    %v484 = vld [vmem:[%s482 + $0x8] sm:$0xff]
    %v485 = vld [vmem:[%s482 + $0x10] sm:$0xff]
    %v486 = vld [vmem:[%s482 + $0x18] sm:$0xff]
    %v487 = vld [vmem:[%s482 + $0x20] sm:$0xff]
    %v488 = vld [vmem:[%s482 + $0x28] sm:$0xff]
    %v489 = vld [vmem:[%s482 + $0x30] sm:$0xff]
    %v490 = vld [vmem:[%s482 + $0x38] sm:$0xff]
    %v491 = vld [vmem:[%s482 + $0x40] sm:$0xff]
    %v492 = vld [vmem:[%s482 + $0x48] sm:$0xff]
    %v493 = vld [vmem:[%s482 + $0x50] sm:$0xff]
    %v494 = vld [vmem:[%s482 + $0x58] sm:$0xff]
    %s495 = scalar_lea.vmem %s5, 1
    %v496 = vld [vmem:[%s495] sm:$0x1]
    %v498 = vlaneseq
    %v499 = vshrl.u32 %v498, 7
    %v500 = vsub.s32 0, %v499
    %v501 = vrot.slane %v496, %v500
    %v504 = vsel %vm342, %v480, 0
    %v507 = vsel %vm342, %v481, 0
    %509 = vmatprep.subr.mxu0 0.0
    %510 = vmatpush1.msra.mxu0 0.0
    %511 = vmatprep.subr.mxu0 0.0
    %512 = vmatpush1.msra.mxu0 0.0
    %513 = vmatprep.subr.mxu0 0.0
    %514 = vmatpush1.msra.mxu0 0.0
    %515 = vmatprep.subr.mxu0 0.0
    %516 = vmatpush1.msra.mxu0 0.0
    %517 = vmatprep.subr.mxu0 0.0
    %518 = vmatpush1.msra.mxu0 %v494
    %519 = vmatprep.subr.mxu0 0.0
    %520 = vmatpush1.msra.mxu0 %v493
    %521 = vmatprep.subr.mxu0 0.0
    %522 = vmatpush1.msra.mxu0 %v492
    %523 = vmatprep.subr.mxu0 0.0
    %524 = vmatpush1.msra.mxu0 %v491
    %525 = vmatprep.subr.mxu0 0.0
    %526 = vmatpush1.msra.mxu0 %v490
    %527 = vmatprep.subr.mxu0 0.0
    %528 = vmatpush1.msra.mxu0 %v489
    %529 = vmatprep.subr.mxu0 0.0
    %530 = vmatpush1.msra.mxu0 %v488
    %531 = vmatprep.subr.mxu0 0.0
    %532 = vmatpush1.msra.mxu0 %v487
    %533 = vmatprep.subr.mxu0 0.0
    %534 = vmatpush1.msra.mxu0 %v486
    %535 = vmatprep.subr.mxu0 0.0
    %536 = vmatpush1.msra.mxu0 %v485
    %537 = vmatprep.subr.mxu0 0.0
    %538 = vmatpush1.msra.mxu0 %v484
    %539 = vmatprep.subr.mxu0 0.0
    %540 = vmatpush1.msra.mxu0 %v483
    %541 = vmatprep.subr.mxu0 0.0
    %542 = vmatpush2.msra.mxu0 0.0
    %543 = vmatprep.subr.mxu0 0.0
    %544 = vmatpush2.msra.mxu0 0.0
    %545 = vmatprep.subr.mxu0 0.0
    %546 = vmatpush2.msra.mxu0 0.0
    %547 = vmatprep.subr.mxu0 0.0
    %548 = vmatpush2.msra.mxu0 0.0
    %549 = vmatprep.subr.mxu0 0.0
    %550 = vmatpush2.msra.mxu0 0.0
    %551 = vmatprep.subr.mxu0 0.0
    %552 = vmatpush2.msra.mxu0 0.0
    %553 = vmatprep.subr.mxu0 0.0
    %554 = vmatpush2.msra.mxu0 0.0
    %555 = vmatprep.subr.mxu0 0.0
    %556 = vmatpush2.msra.mxu0 0.0
    %557 = vmatprep.subr.mxu0 0.0
    %558 = vmatpush2.msra.mxu0 0.0
    %559 = vmatprep.subr.mxu0 0.0
    %560 = vmatpush2.msra.mxu0 0.0
    %561 = vmatprep.subr.mxu0 0.0
    %562 = vmatpush2.msra.mxu0 0.0
    %563 = vmatprep.subr.mxu0 0.0
    %564 = vmatpush2.msra.mxu0 0.0
    %565 = vmatprep.subr.mxu0 0.0
    %566 = vmatpush2.msra.mxu0 0.0
    %567 = vmatprep.subr.mxu0 0.0
    %568 = vmatpush2.msra.mxu0 0.0
    %569 = vmatprep.subr.mxu0 0.0
    %570 = vmatpush2.msra.mxu0 0.0
    %571 = vmatprep.subr.mxu0 0.0
    %572 = vmatpush2.msra.mxu0 0.0
    %573 = vmatprep.mubr.f32.mxu0 0.0
    %574 = vmatmul.mubr.f32.gmra.mxu0 %v504
    %v575 = vpop.f32.mrf.mxu0
    %v576 = vadd.f32 %v501, %v575
    %v577 = vpop.f32.mrf.mxu0
    %578 = vmatprep.mubr.f32.mxu0 0.0
    %579 = vmatmul.mubr.f32.gmra.mxu0 %v507
    %v580 = vpop.f32.mrf.mxu0
    %v581 = vadd.f32 %v501, %v580
    %v582 = vpop.f32.mrf.mxu0
    %583 = vdwg.mxu0
    %v584 = vxor.u32 %v576, 2147483648
    %v585 = vxor.u32 %v581, 2147483648
    %v586 = vmul.f32 %v584, 1.442695
    %v587 = vpow.pop %v586
    %v588 = vmul.f32 %v585, 1.442695
    %v589 = vpow.pop %v588
    %v590 = vadd.f32 %v587, 1.0
    %v591 = vadd.f32 %v589, 1.0
    %v592 = vrcp.pop %v590
    %v593 = vmul.f32 1.0, %v592
    %v594 = vrcp.pop %v591
    %v595 = vmul.f32 1.0, %v594
    %598 = vrot.lane.b32.xlu0 %v593, 96
    %v599 = vpop.permute.xlu0 %598
    %600 = vrot.lane.b32.xlu0 %v595, 96
    %v601 = vpop.permute.xlu0 %600
    %v604 = vmul.f32 %v576, %v599
    %v605 = vmul.f32 %v581, %v601
    %v606 = vadd.f32 %v604, %v448
    %v607 = vadd.f32 %v605, %v449
    %v608 = vmul.f32 %v606, 0.70710677
    %v609 = vmul.f32 %v607, 0.70710677
    %v610 = vld [vmem:[%s6] sm:$0xff]
    %v611 = vld [vmem:[%s6 + $0x8] sm:$0xff]
    %v612 = vld [vmem:[%s6 + $0x10] sm:$0xff]
    %v613 = vld [vmem:[%s6 + $0x18] sm:$0xff]
    %v614 = vld [vmem:[%s7] sm:$0x1]
    %v616 = vlaneseq
    %v617 = vshrl.u32 %v616, 7
    %v618 = vsub.s32 0, %v617
    %v619 = vrot.slane %v614, %v618
    %v622 = vsel %vm174, %v608, 0
    %v625 = vsel %vm174, %v609, 0
    %627 = vmatprep.subr.mxu0 0.0
    %628 = vmatpush1.msra.mxu0 0.0
    %629 = vmatprep.subr.mxu0 0.0
    %630 = vmatpush1.msra.mxu0 0.0
    %631 = vmatprep.subr.mxu0 0.0
    %632 = vmatpush1.msra.mxu0 0.0
    %633 = vmatprep.subr.mxu0 0.0
    %634 = vmatpush1.msra.mxu0 0.0
    %635 = vmatprep.subr.mxu0 0.0
    %636 = vmatpush1.msra.mxu0 0.0
    %637 = vmatprep.subr.mxu0 0.0
    %638 = vmatpush1.msra.mxu0 0.0
    %639 = vmatprep.subr.mxu0 0.0
    %640 = vmatpush1.msra.mxu0 0.0
    %641 = vmatprep.subr.mxu0 0.0
    %642 = vmatpush1.msra.mxu0 0.0
    %643 = vmatprep.subr.mxu0 0.0
    %644 = vmatpush1.msra.mxu0 0.0
    %645 = vmatprep.subr.mxu0 0.0
    %646 = vmatpush1.msra.mxu0 0.0
    %647 = vmatprep.subr.mxu0 0.0
    %648 = vmatpush1.msra.mxu0 0.0
    %649 = vmatprep.subr.mxu0 0.0
    %650 = vmatpush1.msra.mxu0 0.0
    %651 = vmatprep.subr.mxu0 0.0
    %652 = vmatpush1.msra.mxu0 %v613
    %653 = vmatprep.subr.mxu0 0.0
    %654 = vmatpush1.msra.mxu0 %v612
    %655 = vmatprep.subr.mxu0 0.0
    %656 = vmatpush1.msra.mxu0 %v611
    %657 = vmatprep.subr.mxu0 0.0
    %658 = vmatpush1.msra.mxu0 %v610
    %659 = vmatprep.subr.mxu0 0.0
    %660 = vmatpush2.msra.mxu0 0.0
    %661 = vmatprep.subr.mxu0 0.0
    %662 = vmatpush2.msra.mxu0 0.0
    %663 = vmatprep.subr.mxu0 0.0
    %664 = vmatpush2.msra.mxu0 0.0
    %665 = vmatprep.subr.mxu0 0.0
    %666 = vmatpush2.msra.mxu0 0.0
    %667 = vmatprep.subr.mxu0 0.0
    %668 = vmatpush2.msra.mxu0 0.0
    %669 = vmatprep.subr.mxu0 0.0
    %670 = vmatpush2.msra.mxu0 0.0
    %671 = vmatprep.subr.mxu0 0.0
    %672 = vmatpush2.msra.mxu0 0.0
    %673 = vmatprep.subr.mxu0 0.0
    %674 = vmatpush2.msra.mxu0 0.0
    %675 = vmatprep.subr.mxu0 0.0
    %676 = vmatpush2.msra.mxu0 0.0
    %677 = vmatprep.subr.mxu0 0.0
    %678 = vmatpush2.msra.mxu0 0.0
    %679 = vmatprep.subr.mxu0 0.0
    %680 = vmatpush2.msra.mxu0 0.0
    %681 = vmatprep.subr.mxu0 0.0
    %682 = vmatpush2.msra.mxu0 0.0
    %683 = vmatprep.subr.mxu0 0.0
    %684 = vmatpush2.msra.mxu0 0.0
    %685 = vmatprep.subr.mxu0 0.0
    %686 = vmatpush2.msra.mxu0 0.0
    %687 = vmatprep.subr.mxu0 0.0
    %688 = vmatpush2.msra.mxu0 0.0
    %689 = vmatprep.subr.mxu0 0.0
    %690 = vmatpush2.msra.mxu0 0.0
    %691 = vmatprep.mubr.f32.mxu0 0.0
    %692 = vmatmul.mubr.f32.gmra.mxu0 %v622
    %v693 = vpop.f32.mrf.mxu0
    %v694 = vadd.f32 %v619, %v693
    %v695 = vpop.f32.mrf.mxu0
    %696 = vmatprep.mubr.f32.mxu0 0.0
    %697 = vmatmul.mubr.f32.gmra.mxu0 %v625
    %v698 = vpop.f32.mrf.mxu0
    %v699 = vadd.f32 %v619, %v698
    %v700 = vpop.f32.mrf.mxu0
    %701 = vdwg.mxu0
    %v702 = vadd.f32 %v694, %v155
    %v703 = vadd.f32 %v699, %v160
    %v704 = vmul.f32 %v702, 0.70710677
    %v705 = vmul.f32 %v703, 0.70710677
    %708 = vrot.lane.b32.xlu0 %v704, 32
    %v709 = vpop.permute.xlu0 %708
    %710 = vrot.lane.b32.xlu0 %v705, 32
    %v711 = vpop.permute.xlu0 %710
    %v714 = vsel %vm174, %v694, %v709
    %v715 = vsel %vm174, %v699, %v711
    %716 = vst.msk [vmem:[#allocation2] sm:$0xff] %vm320, %v714
    %717 = vst.msk [vmem:[#allocation2 + $0x8] sm:$0xff] %vm320, %v715
    // Predicated region
    $region34: #{tpu_custom_call.1} parent=1 // pred_check
      _
    $region35: #{tpu_custom_call.1} parent=1 // pred_check_branch
      %719 = sbr.rel (0) target = $region37
    $region36: #{tpu_custom_call.1} parent=1 // pred_region
      %s721 = ssub.s32 256, 256
      %722 = vsyncadd [#allocation3], %s721
      %s723 = sshll.u32 [#allocation2], 4
      %s724 = int_to_ptr.vmem [resolvable:$true] %s723
      %729 = dma.vmem_to_hbm [thread:$0]  %s724, 256, %s8, [#allocation3], 128, 128, 8
    $region37: #{tpu_custom_call.1} parent=1 // pred_fallthru
      _
    // Predicated region
    $region38: #{tpu_custom_call.1} parent=1 // pred_check
      _
    $region39: #{tpu_custom_call.1} parent=1 // pred_check_branch
      %731 = sbr.rel (0) target = $region41
    $region40: #{tpu_custom_call.1} parent=1 // pred_region
      %732 = dma.done [#allocation3], 256
    $region41: #{tpu_custom_call.1} parent=1 // pred_fallthru
      _
    %733 = vsyncpa [#allocation3], 1

</llo_original>
